<compile_context>
chip_gen: v6e
topology: v6e:2x2x1
jax: 0.10.0
libtpu: 0.0.40
codegen_flags: <defaults>
</compile_context>

<pallas_src>
import jax
import jax.numpy as jnp
from jax.experimental import pallas as pl
from jax.experimental.pallas import tpu as pltpu


# ----------------------------------------------------------------------------
# Bilinear interpolation matrix (F.interpolate, mode='bilinear', align_corners=False)
# ----------------------------------------------------------------------------
def bilinear_matrix(in_size, out_size=64):
    scale = in_size / out_size
    dst = jnp.arange(out_size, dtype=jnp.float32)
    src = jnp.maximum(scale * (dst + 0.5) - 0.5, 0.0)
    i0 = jnp.minimum(jnp.floor(src).astype(jnp.int32), in_size - 1)
    i1 = jnp.minimum(i0 + 1, in_size - 1)
    lam = src - i0.astype(jnp.float32)
    rows = jnp.arange(out_size, dtype=jnp.int32)
    m = jnp.zeros((out_size, in_size), jnp.float32)
    m = m.at[rows, i0].add(1.0 - lam)
    m = m.at[rows, i1].add(lam)
    return m


def _tensorcores_per_device():
    """# of TensorCores a 'parallel' grid axis is split across on this chip."""
    try:
        kind = jax.devices()[0].device_kind.lower()
    except Exception:
        return 1
    if "v7" in kind or "tpu7" in kind:                              # v7x: 2 TCs/chip
        return 2
    if "v5p" in kind or ("v4" in kind and "lite" not in kind):      # megacore
        return 2
    return 1                                                        # v5e / v6e / unknown


# ----------------------------------------------------------------------------
# Fused forward: one pallas_call
# ----------------------------------------------------------------------------
def bias_correction_forward(embedding, conv_w, conv_b):
    B, C, H, W = embedding.shape
    Cout = conv_w.shape[0]
    CW = C * W
    NE = C * 64                      # embedding_64 slab width (lane-dense)
    NC = Cout * 64                   # out_em slab width (lane-dense)
    NT = NE + NC                     # merged output width

    # --- trace-time interpolation constants (constant-folded by XLA) ---------
    wh16 = bilinear_matrix(H)                         # (64, H)
    ww16 = bilinear_matrix(W)                         # (64, W)
    wh18c = bilinear_matrix(H + 2)[:, 1:H + 1]        # (64, H)  conv pad=1 folded away
    ww18c = bilinear_matrix(W + 2)[:, 1:W + 1]        # (64, W)

    w2d = conv_w.reshape(Cout, C).astype(jnp.float32)
    b1d = conv_b.reshape(Cout).astype(jnp.float32)

    # --- generation-aware grid: bb batch elements folded into matmul rows ----
    tcs = _tensorcores_per_device()
    bb = (B // tcs) if (tcs > 1 and B % tcs == 0) else B
    steps = B // bb

    # Height matrix for both paths: [wh16 ; 2*wh18c], block-diagonal over the
    # bb batch elements of one grid step.
    # TODO(synk): PUAModule definition is not provided in the reference source;
    # treated as identity, so pua-branch + conv-branch == 2*(conv-branch); that
    # is the 2.0 factor folded here and into bias_row below.
    whcat1 = jnp.concatenate([wh16, 2.0 * wh18c], axis=0)            # (128, H)
    whcat = jnp.zeros((bb * 128, bb * H), jnp.float32)
    for b in range(bb):
        whcat = whcat.at[b * 128:(b + 1) * 128, b * H:(b + 1) * H].set(whcat1)

    # Width matrix R (2*CW, NT):
    #   rows [0, CW)    x cols [0, NE)  : block-diag ww16^T       (embedding_64 path)
    #   rows [CW, 2*CW) x cols [NE, NT) : conv_w[o,c] * ww18c^T   (conv 4->2 mix folded)
    rhs = jnp.zeros((2 * CW, NT), jnp.float32)
    for c in range(C):
        rhs = rhs.at[c * W:(c + 1) * W, c * 64:(c + 1) * 64].set(ww16.T)
    mix = jnp.einsum("oc,qw->cwoq", w2d, ww18c).reshape(CW, NC)
    rhs = rhs.at[CW:2 * CW, NE:].set(mix)

    # bias row: 0 for the embedding_64 columns, 2*b[o] for out_em columns.
    bias_row = jnp.concatenate(
        [jnp.zeros((NE,), jnp.float32), jnp.repeat(2.0 * b1d, 64)]).reshape(1, NT)

    # x laid out (B*H, C*W): channels in the lane dimension (8 KB, cheap transpose).
    x_wide = embedding.astype(jnp.float32).transpose(0, 2, 1, 3).reshape(B * H, CW)

    def kernel(x_ref, wh_ref, rhs_ref, bias_ref, out_ref):
        # (bb*128, bb*H) @ (bb*H, CW) -> (bb*128, CW): both height resizes at once.
        xh = jnp.dot(wh_ref[...], x_ref[...], preferred_element_type=jnp.float32)
        parts = []
        for b in range(bb):
            base = b * 128
            parts.append(jnp.concatenate(
                [xh[base:base + 64, :], xh[base + 64:base + 128, :]], axis=1))
        lhs = parts[0] if bb == 1 else jnp.concatenate(parts, axis=0)  # (bb*64, 2*CW)
        # (bb*64, 2*CW) @ (2*CW, NT): width resizes + conv mix; one lane-dense store.
        out_ref[...] = (jnp.dot(lhs, rhs_ref[...], preferred_element_type=jnp.float32)
                        + bias_ref[...])

    slab = pl.pallas_call(
        kernel,
        out_shape=jax.ShapeDtypeStruct((B * 64, NT), jnp.float32),
        grid_spec=pltpu.PrefetchScalarGridSpec(
            num_scalar_prefetch=0,
            grid=(steps,),
            in_specs=[
                pl.BlockSpec((bb * H, CW), lambda g: (g, 0)),        # x
                pl.BlockSpec((bb * 128, bb * H), lambda g: (0, 0)),  # height matrix
                pl.BlockSpec((2 * CW, NT), lambda g: (0, 0)),        # width matrix
                pl.BlockSpec((1, NT), lambda g: (0, 0)),             # bias row
            ],
            out_specs=pl.BlockSpec((bb * 64, NT), lambda g: (g, 0)),
        ),
        compiler_params=pltpu.CompilerParams(
            dimension_semantics=("parallel",)),   # 2-way split on v7x; no-op on v5e/v6e
    )(x_wide, whcat, rhs, bias_row)

    # Layout fixup back to the module's NCHW outputs (cheap wrapper transposes).
    slab = slab.reshape(B, 64, NT)
    emb64 = slab[:, :, :NE].reshape(B, 64, C, 64).transpose(0, 2, 1, 3)   # (B, C, 64, 64)
    out_em = slab[:, :, NE:].reshape(B, 64, Cout, 64).transpose(0, 2, 1, 3)  # (B, Cout, 64, 64)
    return out_em, emb64


# ----------------------------------------------------------------------------
# Pure-JAX reference following the PyTorch module structure literally
# ----------------------------------------------------------------------------
def _ref_forward(x, w, b):
    B, C, H, W = x.shape
    Cout = w.shape[0]

    def up64(t):
        hh, ww = t.shape[-2], t.shape[-1]
        return jnp.einsum("oh,bchw,pw->bcop", bilinear_matrix(hh), t, bilinear_matrix(ww))

    def conv_pad1(t):
        y = jnp.einsum("bchw,oc->bohw", t, w.reshape(Cout, C)) + b.reshape(1, Cout, 1, 1)
        full = jnp.broadcast_to(b.reshape(1, Cout, 1, 1),
                                (B, Cout, H + 2, W + 2)).astype(jnp.float32)
        return full.at[:, :, 1:H + 1, 1:W + 1].set(y)

    e64 = up64(x)
    pua = x                       # identity PUA (see TODO in the wrapper)
    ec = conv_pad1(x)
    pc = conv_pad1(pua)
    return up64(pc) + up64(ec), e64


if __name__ == "__main__":
    out_channels = 4              # module arg; conv is Conv2d(4 -> 2, k=1, pad=1)
    B, H, W = 2, 16, 16

    key = jax.random.PRNGKey(0)
    k_x, k_w, k_b = jax.random.split(key, 3)
    x = jax.random.normal(k_x, (B, out_channels, H, W), dtype=jnp.float32)
    conv_w = 0.1 * jax.random.normal(
        k_w, (out_channels // 2, out_channels, 1, 1), dtype=jnp.float32)
    conv_b = 0.1 * jax.random.normal(k_b, (out_channels // 2,), dtype=jnp.float32)

    fwd = jax.jit(bias_correction_forward)
    out_em, emb64 = fwd(x, conv_w, conv_b)
    jax.block_until_ready((out_em, emb64))

    ref_out, ref_e64 = _ref_forward(x, conv_w, conv_b)
    assert out_em.shape == (B, out_channels // 2, 64, 64)
    assert emb64.shape == (B, out_channels, 64, 64)
    assert jnp.allclose(out_em, ref_out, atol=1e-4, rtol=1e-4)
    assert jnp.allclose(emb64, ref_e64, atol=1e-4, rtol=1e-4)

    print("KERNEL_OK")
</pallas_src>

<mosaic_0001>
module attributes {stable_mosaic.version = 11 : i64} {
  func.func private @main(%arg0: i32) attributes {dimension_semantics = [#tpu.dimension_semantics<core_parallel>], iteration_bounds = array<i64: 2>, tpu.core_type = #tpu.core_type<sc_scalar_subcore>, window_params = []} {
    return
  }
}

module attributes {stable_mosaic.version = 11 : i64} {
  func.func private @main(%arg0: i32) attributes {dimension_semantics = [#tpu.dimension_semantics<core_parallel>], iteration_bounds = array<i64: 2>, tpu.core_type = #tpu.core_type<sc_scalar_subcore>, window_params = []} {
    return
  }
}

module attributes {stable_mosaic.version = 11 : i64} {
  func.func @kernel(%arg0: i32, %arg1: memref<32x64xf32, #tpu.memory_space<vmem>>, %arg2: memref<256x32xf32, #tpu.memory_space<vmem>>, %arg3: memref<128x384xf32, #tpu.memory_space<vmem>>, %arg4: memref<1x384xf32, #tpu.memory_space<vmem>>, %arg5: memref<128x384xf32, #tpu.memory_space<vmem>>) attributes {dimension_semantics = [#tpu.dimension_semantics<parallel>], iteration_bounds = array<i64: 1>, scalar_prefetch = 0 : i64, scratch_operands = 0 : i64, tpu.core_type = #tpu.core_type<tc>, window_params = [{transform_indices = @transform_0, window_bounds = array<i64: 32, 64>}, {pipeline_mode = #tpu.pipeline_mode<synchronous>, transform_indices = @transform_1, window_bounds = array<i64: 256, 32>}, {pipeline_mode = #tpu.pipeline_mode<synchronous>, transform_indices = @transform_2, window_bounds = array<i64: 128, 384>}, {pipeline_mode = #tpu.pipeline_mode<synchronous>, transform_indices = @transform_3, window_bounds = array<i64: 1, 384>}, {transform_indices = @transform_4, window_bounds = array<i64: 128, 384>}]} {
    %c0 = arith.constant 0 : index
    %c0_0 = arith.constant 0 : index
    %0 = vector.load %arg2[%c0, %c0_0] : memref<256x32xf32, #tpu.memory_space<vmem>>, vector<256x32xf32>
    %c0_1 = arith.constant 0 : index
    %c0_2 = arith.constant 0 : index
    %1 = vector.load %arg1[%c0_1, %c0_2] : memref<32x64xf32, #tpu.memory_space<vmem>>, vector<32x64xf32>
    %cst = arith.constant dense<0.000000e+00> : vector<256x64xf32>
    %2 = tpu.matmul %0, %1, %cst {dimension_numbers = #tpu.dot_dimension_numbers<[1], [0], [0], [1], [0, 0, 1, 1], [], []>} : vector<256x32xf32>, vector<32x64xf32>, vector<256x64xf32> -> vector<256x64xf32>
    %3 = vector.extract_strided_slice %2 {offsets = [0, 0], sizes = [64, 64], strides = [1, 1]} : vector<256x64xf32> to vector<64x64xf32>
    %4 = vector.extract_strided_slice %2 {offsets = [64, 0], sizes = [64, 64], strides = [1, 1]} : vector<256x64xf32> to vector<64x64xf32>
    %5 = tpu.concatenate %3, %4 in 1 : vector<64x64xf32>, vector<64x64xf32> -> vector<64x128xf32>
    %6 = vector.extract_strided_slice %2 {offsets = [128, 0], sizes = [64, 64], strides = [1, 1]} : vector<256x64xf32> to vector<64x64xf32>
    %7 = vector.extract_strided_slice %2 {offsets = [192, 0], sizes = [64, 64], strides = [1, 1]} : vector<256x64xf32> to vector<64x64xf32>
    %8 = tpu.concatenate %6, %7 in 1 : vector<64x64xf32>, vector<64x64xf32> -> vector<64x128xf32>
    %9 = tpu.concatenate %5, %8 in 0 : vector<64x128xf32>, vector<64x128xf32> -> vector<128x128xf32>
    %c0_3 = arith.constant 0 : index
    %c0_4 = arith.constant 0 : index
    %10 = vector.load %arg3[%c0_3, %c0_4] : memref<128x384xf32, #tpu.memory_space<vmem>>, vector<128x384xf32>
    %cst_5 = arith.constant dense<0.000000e+00> : vector<128x384xf32>
    %11 = tpu.matmul %9, %10, %cst_5 {dimension_numbers = #tpu.dot_dimension_numbers<[1], [0], [0], [1], [0, 0, 1, 1], [], []>} : vector<128x128xf32>, vector<128x384xf32>, vector<128x384xf32> -> vector<128x384xf32>
    %c0_6 = arith.constant 0 : index
    %c0_7 = arith.constant 0 : index
    %12 = vector.load %arg4[%c0_6, %c0_7] : memref<1x384xf32, #tpu.memory_space<vmem>>, vector<1x384xf32>
    %13 = vector.broadcast %12 : vector<1x384xf32> to vector<128x384xf32>
    %14 = arith.addf %11, %13 : vector<128x384xf32>
    %c0_8 = arith.constant 0 : index
    %c0_9 = arith.constant 0 : index
    %15 = vector.load %arg5[%c0_8, %c0_9] : memref<128x384xf32, #tpu.memory_space<vmem>>, vector<128x384xf32>
    tpu.vector_store %arg5[%c0_8, %c0_9], %14 {strides = array<i32>} : memref<128x384xf32, #tpu.memory_space<vmem>>, vector<128x384xf32>,
    return
  }
  func.func @transform_0(%arg0: i32) -> (i32, i32) {
    %c0_i32 = arith.constant 0 : i32
    %c0_i32_0 = arith.constant 0 : i32
    return %arg0, %c0_i32 : i32, i32
  }
  func.func @transform_1(%arg0: i32) -> (i32, i32) {
    %c0_i32 = arith.constant 0 : i32
    %c0_i32_0 = arith.constant 0 : i32
    %c0_i32_1 = arith.constant 0 : i32
    return %c0_i32, %c0_i32_0 : i32, i32
  }
  func.func @transform_2(%arg0: i32) -> (i32, i32) {
    %c0_i32 = arith.constant 0 : i32
    %c0_i32_0 = arith.constant 0 : i32
    %c0_i32_1 = arith.constant 0 : i32
    return %c0_i32, %c0_i32_0 : i32, i32
  }
  func.func @transform_3(%arg0: i32) -> (i32, i32) {
    %c0_i32 = arith.constant 0 : i32
    %c0_i32_0 = arith.constant 0 : i32
    %c0_i32_1 = arith.constant 0 : i32
    return %c0_i32, %c0_i32_0 : i32, i32
  }
  func.func @transform_4(%arg0: i32) -> (i32, i32) {
    %c0_i32 = arith.constant 0 : i32
    %c0_i32_0 = arith.constant 0 : i32
    return %arg0, %c0_i32 : i32, i32
  }
}

</mosaic_0001>

<llo_original>
// kernel: bias_correction_forward.1
$region0: #{bias_correction_forward.1}
  #allocation0 [shape = 'u32[]', space=smem, size = 0x4, offset = 0x4, fixed_abs, tag = 'smem constant byte address 0x4 - core index']
  #allocation1 [shape = 'u32[144,128]{1,0:T(1,128)}', space=vmem, size = 0x12000, scoped, tag = 'internal scratch']
  %s0 = inlined_call_operand.vmem [shape: f32[32,64], index: 0, kind: input, shape index: {}]
  %s1 = inlined_call_operand.vmem [shape: f32[256,32], index: 1, kind: input, shape index: {}]
  %s2 = inlined_call_operand.vmem [shape: f32[128,384], index: 2, kind: input, shape index: {}]
  %s3 = inlined_call_operand.vmem [shape: f32[1,384], index: 3, kind: input, shape index: {}]
  %s4 = inlined_call_operand.vmem [shape: f32[128,384], index: 4, kind: output, shape index: {}]
  %s5 = sld [smem:[#allocation0]]
  $region26: #{bias_correction_forward.1} parent=0
    _
  %s7 = ssub.s32 1, %s5
  %s8 = scalar_select 0, %s7, %s5
  // Predicated region
  $region2: #{bias_correction_forward.1} parent=0 // pred_check
    _
  $region3: #{bias_correction_forward.1} parent=0 // pred_check_branch
    %10 = sbr.rel (0) target = $region5
  $region4: #{bias_correction_forward.1} parent=0 // pred_region
    _
  $region5: #{bias_correction_forward.1} parent=0 // pred_fallthru
    _
  // Predicated region
  $region6: #{bias_correction_forward.1} parent=0 // pred_check
    _
  $region7: #{bias_correction_forward.1} parent=0 // pred_check_branch
    %12 = sbr.rel (0) target = $region9
  $region8: #{bias_correction_forward.1} parent=0 // pred_region
    _
  $region9: #{bias_correction_forward.1} parent=0 // pred_fallthru
    _
  // Predicated region
  $region10: #{bias_correction_forward.1} parent=0 // pred_check
    _
  $region11: #{bias_correction_forward.1} parent=0 // pred_check_branch
    %14 = sbr.rel (0) target = $region13
  $region12: #{bias_correction_forward.1} parent=0 // pred_region
    _
  $region13: #{bias_correction_forward.1} parent=0 // pred_fallthru
    _
  // Predicated region
  $region14: #{bias_correction_forward.1} parent=0 // pred_check
    _
  $region15: #{bias_correction_forward.1} parent=0 // pred_check_branch
    %16 = sbr.rel (0) target = $region17
  $region16: #{bias_correction_forward.1} parent=0 // pred_region
    _
  $region17: #{bias_correction_forward.1} parent=0 // pred_fallthru
    _
  %v17 = vld [vmem:[%s1] sm:$0xff]
  %v18 = vld [vmem:[%s1 + $0x8] sm:$0xff]
  %v19 = vld [vmem:[%s1 + $0x10] sm:$0xff]
  %v20 = vld [vmem:[%s1 + $0x18] sm:$0xff]
  %v21 = vld [vmem:[%s1 + $0x20] sm:$0xff]
  %v22 = vld [vmem:[%s1 + $0x28] sm:$0xff]
  %v23 = vld [vmem:[%s1 + $0x30] sm:$0xff]
  %v24 = vld [vmem:[%s1 + $0x38] sm:$0xff]
  %v25 = vld [vmem:[%s1 + $0x40] sm:$0xff]
  %v26 = vld [vmem:[%s1 + $0x48] sm:$0xff]
  %v27 = vld [vmem:[%s1 + $0x50] sm:$0xff]
  %v28 = vld [vmem:[%s1 + $0x58] sm:$0xff]
  %v29 = vld [vmem:[%s1 + $0x60] sm:$0xff]
  %v30 = vld [vmem:[%s1 + $0x68] sm:$0xff]
  %v31 = vld [vmem:[%s1 + $0x70] sm:$0xff]
  %v32 = vld [vmem:[%s1 + $0x78] sm:$0xff]
  %v33 = vld [vmem:[%s1 + $0x80] sm:$0xff]
  %v34 = vld [vmem:[%s1 + $0x88] sm:$0xff]
  %v35 = vld [vmem:[%s1 + $0x90] sm:$0xff]
  %v36 = vld [vmem:[%s1 + $0x98] sm:$0xff]
  %v37 = vld [vmem:[%s1 + $0xa0] sm:$0xff]
  %v38 = vld [vmem:[%s1 + $0xa8] sm:$0xff]
  %v39 = vld [vmem:[%s1 + $0xb0] sm:$0xff]
  %v40 = vld [vmem:[%s1 + $0xb8] sm:$0xff]
  %v41 = vld [vmem:[%s1 + $0xc0] sm:$0xff]
  %v42 = vld [vmem:[%s1 + $0xc8] sm:$0xff]
  %v43 = vld [vmem:[%s1 + $0xd0] sm:$0xff]
  %v44 = vld [vmem:[%s1 + $0xd8] sm:$0xff]
  %v45 = vld [vmem:[%s1 + $0xe0] sm:$0xff]
  %v46 = vld [vmem:[%s1 + $0xe8] sm:$0xff]
  %v47 = vld [vmem:[%s1 + $0xf0] sm:$0xff]
  %v48 = vld [vmem:[%s1 + $0xf8] sm:$0xff]
  %v49 = vld [vmem:[%s0] sm:$0xff]
  %v50 = vld [vmem:[%s0 + $0x8] sm:$0xff]
  %v51 = vld [vmem:[%s0 + $0x10] sm:$0xff]
  %v52 = vld [vmem:[%s0 + $0x18] sm:$0xff]
  %vm53 = vcmask 261120
  %v55 = vsel %vm53, %v17, 0
  %v58 = vsel %vm53, %v18, 0
  %v61 = vsel %vm53, %v19, 0
  %v64 = vsel %vm53, %v20, 0
  %v67 = vsel %vm53, %v21, 0
  %v70 = vsel %vm53, %v22, 0
  %v73 = vsel %vm53, %v23, 0
  %v76 = vsel %vm53, %v24, 0
  %v79 = vsel %vm53, %v25, 0
  %v82 = vsel %vm53, %v26, 0
  %v85 = vsel %vm53, %v27, 0
  %v88 = vsel %vm53, %v28, 0
  %v91 = vsel %vm53, %v29, 0
  %v94 = vsel %vm53, %v30, 0
  %v97 = vsel %vm53, %v31, 0
  %v100 = vsel %vm53, %v32, 0
  %v103 = vsel %vm53, %v33, 0
  %v106 = vsel %vm53, %v34, 0
  %v109 = vsel %vm53, %v35, 0
  %v112 = vsel %vm53, %v36, 0
  %v115 = vsel %vm53, %v37, 0
  %v118 = vsel %vm53, %v38, 0
  %v121 = vsel %vm53, %v39, 0
  %v124 = vsel %vm53, %v40, 0
  %v127 = vsel %vm53, %v41, 0
  %v130 = vsel %vm53, %v42, 0
  %v133 = vsel %vm53, %v43, 0
  %v136 = vsel %vm53, %v44, 0
  %v139 = vsel %vm53, %v45, 0
  %v142 = vsel %vm53, %v46, 0
  %v145 = vsel %vm53, %v47, 0
  %v148 = vsel %vm53, %v48, 0
  %150 = vmatprep.subr.mxu0 0.0
  %151 = vmatpush1.msra.mxu0 0.0
  %152 = vmatprep.subr.mxu0 0.0
  %153 = vmatpush1.msra.mxu0 0.0
  %154 = vmatprep.subr.mxu0 0.0
  %155 = vmatpush1.msra.mxu0 0.0
  %156 = vmatprep.subr.mxu0 0.0
  %157 = vmatpush1.msra.mxu0 0.0
  %158 = vmatprep.subr.mxu0 0.0
  %159 = vmatpush1.msra.mxu0 0.0
  %160 = vmatprep.subr.mxu0 0.0
  %161 = vmatpush1.msra.mxu0 0.0
  %162 = vmatprep.subr.mxu0 0.0
  %163 = vmatpush1.msra.mxu0 0.0
  %164 = vmatprep.subr.mxu0 0.0
  %165 = vmatpush1.msra.mxu0 0.0
  %166 = vmatprep.subr.mxu0 0.0
  %167 = vmatpush1.msra.mxu0 0.0
  %168 = vmatprep.subr.mxu0 0.0
  %169 = vmatpush1.msra.mxu0 0.0
  %170 = vmatprep.subr.mxu0 0.0
  %171 = vmatpush1.msra.mxu0 0.0
  %172 = vmatprep.subr.mxu0 0.0
  %173 = vmatpush1.msra.mxu0 0.0
  %174 = vmatprep.subr.mxu0 0.0
  %175 = vmatpush1.msra.mxu0 %v52
  %176 = vmatprep.subr.mxu0 0.0
  %177 = vmatpush1.msra.mxu0 %v51
  %178 = vmatprep.subr.mxu0 0.0
  %179 = vmatpush1.msra.mxu0 %v50
  %180 = vmatprep.subr.mxu0 0.0
  %181 = vmatpush1.msra.mxu0 %v49
  %182 = vmatprep.subr.mxu0 0.0
  %183 = vmatpush2.msra.mxu0 0.0
  %184 = vmatprep.subr.mxu0 0.0
  %185 = vmatpush2.msra.mxu0 0.0
  %186 = vmatprep.subr.mxu0 0.0
  %187 = vmatpush2.msra.mxu0 0.0
  %188 = vmatprep.subr.mxu0 0.0
  %189 = vmatpush2.msra.mxu0 0.0
  %190 = vmatprep.subr.mxu0 0.0
  %191 = vmatpush2.msra.mxu0 0.0
  %192 = vmatprep.subr.mxu0 0.0
  %193 = vmatpush2.msra.mxu0 0.0
  %194 = vmatprep.subr.mxu0 0.0
  %195 = vmatpush2.msra.mxu0 0.0
  %196 = vmatprep.subr.mxu0 0.0
  %197 = vmatpush2.msra.mxu0 0.0
  %198 = vmatprep.subr.mxu0 0.0
  %199 = vmatpush2.msra.mxu0 0.0
  %200 = vmatprep.subr.mxu0 0.0
  %201 = vmatpush2.msra.mxu0 0.0
  %202 = vmatprep.subr.mxu0 0.0
  %203 = vmatpush2.msra.mxu0 0.0
  %204 = vmatprep.subr.mxu0 0.0
  %205 = vmatpush2.msra.mxu0 0.0
  %206 = vmatprep.subr.mxu0 0.0
  %207 = vmatpush2.msra.mxu0 0.0
  %208 = vmatprep.subr.mxu0 0.0
  %209 = vmatpush2.msra.mxu0 0.0
  %210 = vmatprep.subr.mxu0 0.0
  %211 = vmatpush2.msra.mxu0 0.0
  %212 = vmatprep.subr.mxu0 0.0
  %213 = vmatpush2.msra.mxu0 0.0
  %214 = vmatprep.mubr.f32.mxu0 0.0
  %215 = vmatmul.mubr.f32.gmra.mxu0 %v55
  %v216 = vpop.f32.mrf.mxu0
  %v217 = vadd.f32 0.0, %v216
  %v218 = vpop.f32.mrf.mxu0
  %219 = vmatprep.mubr.f32.mxu0 0.0
  %220 = vmatmul.mubr.f32.gmra.mxu0 %v58
  %v221 = vpop.f32.mrf.mxu0
  %v222 = vadd.f32 0.0, %v221
  %v223 = vpop.f32.mrf.mxu0
  %224 = vmatprep.mubr.f32.mxu0 0.0
  %225 = vmatmul.mubr.f32.gmra.mxu0 %v61
  %v226 = vpop.f32.mrf.mxu0
  %v227 = vadd.f32 0.0, %v226
  %v228 = vpop.f32.mrf.mxu0
  %229 = vmatprep.mubr.f32.mxu0 0.0
  %230 = vmatmul.mubr.f32.gmra.mxu0 %v64
  %v231 = vpop.f32.mrf.mxu0
  %v232 = vadd.f32 0.0, %v231
  %v233 = vpop.f32.mrf.mxu0
  %234 = vmatprep.mubr.f32.mxu0 0.0
  %235 = vmatmul.mubr.f32.gmra.mxu0 %v67
  %v236 = vpop.f32.mrf.mxu0
  %v237 = vadd.f32 0.0, %v236
  %v238 = vpop.f32.mrf.mxu0
  %239 = vmatprep.mubr.f32.mxu0 0.0
  %240 = vmatmul.mubr.f32.gmra.mxu0 %v70
  %v241 = vpop.f32.mrf.mxu0
  %v242 = vadd.f32 0.0, %v241
  %v243 = vpop.f32.mrf.mxu0
  %244 = vmatprep.mubr.f32.mxu0 0.0
  %245 = vmatmul.mubr.f32.gmra.mxu0 %v73
  %v246 = vpop.f32.mrf.mxu0
  %v247 = vadd.f32 0.0, %v246
  %v248 = vpop.f32.mrf.mxu0
  %249 = vmatprep.mubr.f32.mxu0 0.0
  %250 = vmatmul.mubr.f32.gmra.mxu0 %v76
  %v251 = vpop.f32.mrf.mxu0
  %v252 = vadd.f32 0.0, %v251
  %v253 = vpop.f32.mrf.mxu0
  %254 = vmatprep.mubr.f32.mxu0 0.0
  %255 = vmatmul.mubr.f32.gmra.mxu0 %v79
  %v256 = vpop.f32.mrf.mxu0
  %v257 = vadd.f32 0.0, %v256
  %v258 = vpop.f32.mrf.mxu0
  %259 = vmatprep.mubr.f32.mxu0 0.0
  %260 = vmatmul.mubr.f32.gmra.mxu0 %v82
  %v261 = vpop.f32.mrf.mxu0
  %v262 = vadd.f32 0.0, %v261
  %v263 = vpop.f32.mrf.mxu0
  %264 = vmatprep.mubr.f32.mxu0 0.0
  %265 = vmatmul.mubr.f32.gmra.mxu0 %v85
  %v266 = vpop.f32.mrf.mxu0
  %v267 = vadd.f32 0.0, %v266
  %v268 = vpop.f32.mrf.mxu0
  %269 = vmatprep.mubr.f32.mxu0 0.0
  %270 = vmatmul.mubr.f32.gmra.mxu0 %v88
  %v271 = vpop.f32.mrf.mxu0
  %v272 = vadd.f32 0.0, %v271
  %v273 = vpop.f32.mrf.mxu0
  %274 = vmatprep.mubr.f32.mxu0 0.0
  %275 = vmatmul.mubr.f32.gmra.mxu0 %v91
  %v276 = vpop.f32.mrf.mxu0
  %v277 = vadd.f32 0.0, %v276
  %v278 = vpop.f32.mrf.mxu0
  %279 = vmatprep.mubr.f32.mxu0 0.0
  %280 = vmatmul.mubr.f32.gmra.mxu0 %v94
  %v281 = vpop.f32.mrf.mxu0
  %v282 = vadd.f32 0.0, %v281
  %v283 = vpop.f32.mrf.mxu0
  %284 = vmatprep.mubr.f32.mxu0 0.0
  %285 = vmatmul.mubr.f32.gmra.mxu0 %v97
  %v286 = vpop.f32.mrf.mxu0
  %v287 = vadd.f32 0.0, %v286
  %v288 = vpop.f32.mrf.mxu0
  %289 = vmatprep.mubr.f32.mxu0 0.0
  %290 = vmatmul.mubr.f32.gmra.mxu0 %v100
  %v291 = vpop.f32.mrf.mxu0
  %v292 = vadd.f32 0.0, %v291
  %v293 = vpop.f32.mrf.mxu0
  %294 = vmatprep.mubr.f32.mxu0 0.0
  %295 = vmatmul.mubr.f32.gmra.mxu0 %v103
  %v296 = vpop.f32.mrf.mxu0
  %v297 = vadd.f32 0.0, %v296
  %v298 = vpop.f32.mrf.mxu0
  %299 = vmatprep.mubr.f32.mxu0 0.0
  %300 = vmatmul.mubr.f32.gmra.mxu0 %v106
  %v301 = vpop.f32.mrf.mxu0
  %v302 = vadd.f32 0.0, %v301
  %v303 = vpop.f32.mrf.mxu0
  %304 = vmatprep.mubr.f32.mxu0 0.0
  %305 = vmatmul.mubr.f32.gmra.mxu0 %v109
  %v306 = vpop.f32.mrf.mxu0
  %v307 = vadd.f32 0.0, %v306
  %v308 = vpop.f32.mrf.mxu0
  %309 = vmatprep.mubr.f32.mxu0 0.0
  %310 = vmatmul.mubr.f32.gmra.mxu0 %v112
  %v311 = vpop.f32.mrf.mxu0
  %v312 = vadd.f32 0.0, %v311
  %v313 = vpop.f32.mrf.mxu0
  %314 = vmatprep.mubr.f32.mxu0 0.0
  %315 = vmatmul.mubr.f32.gmra.mxu0 %v115
  %v316 = vpop.f32.mrf.mxu0
  %v317 = vadd.f32 0.0, %v316
  %v318 = vpop.f32.mrf.mxu0
  %319 = vmatprep.mubr.f32.mxu0 0.0
  %320 = vmatmul.mubr.f32.gmra.mxu0 %v118
  %v321 = vpop.f32.mrf.mxu0
  %v322 = vadd.f32 0.0, %v321
  %v323 = vpop.f32.mrf.mxu0
  %324 = vmatprep.mubr.f32.mxu0 0.0
  %325 = vmatmul.mubr.f32.gmra.mxu0 %v121
  %v326 = vpop.f32.mrf.mxu0
  %v327 = vadd.f32 0.0, %v326
  %v328 = vpop.f32.mrf.mxu0
  %329 = vmatprep.mubr.f32.mxu0 0.0
  %330 = vmatmul.mubr.f32.gmra.mxu0 %v124
  %v331 = vpop.f32.mrf.mxu0
  %v332 = vadd.f32 0.0, %v331
  %v333 = vpop.f32.mrf.mxu0
  %334 = vmatprep.mubr.f32.mxu0 0.0
  %335 = vmatmul.mubr.f32.gmra.mxu0 %v127
  %v336 = vpop.f32.mrf.mxu0
  %v337 = vadd.f32 0.0, %v336
  %v338 = vpop.f32.mrf.mxu0
  %339 = vmatprep.mubr.f32.mxu0 0.0
  %340 = vmatmul.mubr.f32.gmra.mxu0 %v130
  %v341 = vpop.f32.mrf.mxu0
  %v342 = vadd.f32 0.0, %v341
  %v343 = vpop.f32.mrf.mxu0
  %344 = vmatprep.mubr.f32.mxu0 0.0
  %345 = vmatmul.mubr.f32.gmra.mxu0 %v133
  %v346 = vpop.f32.mrf.mxu0
  %v347 = vadd.f32 0.0, %v346
  %v348 = vpop.f32.mrf.mxu0
  %349 = vmatprep.mubr.f32.mxu0 0.0
  %350 = vmatmul.mubr.f32.gmra.mxu0 %v136
  %v351 = vpop.f32.mrf.mxu0
  %v352 = vadd.f32 0.0, %v351
  %v353 = vpop.f32.mrf.mxu0
  %354 = vmatprep.mubr.f32.mxu0 0.0
  %355 = vmatmul.mubr.f32.gmra.mxu0 %v139
  %v356 = vpop.f32.mrf.mxu0
  %v357 = vadd.f32 0.0, %v356
  %v358 = vpop.f32.mrf.mxu0
  %359 = vmatprep.mubr.f32.mxu0 0.0
  %360 = vmatmul.mubr.f32.gmra.mxu0 %v142
  %v361 = vpop.f32.mrf.mxu0
  %v362 = vadd.f32 0.0, %v361
  %v363 = vpop.f32.mrf.mxu0
  %364 = vmatprep.mubr.f32.mxu0 0.0
  %365 = vmatmul.mubr.f32.gmra.mxu0 %v145
  %v366 = vpop.f32.mrf.mxu0
  %v367 = vadd.f32 0.0, %v366
  %v368 = vpop.f32.mrf.mxu0
  %369 = vmatprep.mubr.f32.mxu0 0.0
  %370 = vmatmul.mubr.f32.gmra.mxu0 %v148
  %v371 = vpop.f32.mrf.mxu0
  %v372 = vadd.f32 0.0, %v371
  %v373 = vpop.f32.mrf.mxu0
  %374 = vdwg.mxu0
  %383 = vrot.lane.b32.xlu0 %v257, 64
  %v384 = vpop.permute.xlu0 %383
  %385 = vrot.lane.b32.xlu0 %v262, 64
  %v386 = vpop.permute.xlu0 %385
  %387 = vrot.lane.b32.xlu0 %v267, 64
  %v388 = vpop.permute.xlu0 %387
  %389 = vrot.lane.b32.xlu0 %v272, 64
  %v390 = vpop.permute.xlu0 %389
  %391 = vrot.lane.b32.xlu0 %v277, 64
  %v392 = vpop.permute.xlu0 %391
  %393 = vrot.lane.b32.xlu0 %v282, 64
  %v394 = vpop.permute.xlu0 %393
  %395 = vrot.lane.b32.xlu0 %v287, 64
  %v396 = vpop.permute.xlu0 %395
  %397 = vrot.lane.b32.xlu0 %v292, 64
  %v398 = vpop.permute.xlu0 %397
  %vm407 = vcmask 523264
  %v408 = vsel %vm407, %v217, %v384
  %v409 = vsel %vm407, %v222, %v386
  %v410 = vsel %vm407, %v227, %v388
  %v411 = vsel %vm407, %v232, %v390
  %v412 = vsel %vm407, %v237, %v392
  %v413 = vsel %vm407, %v242, %v394
  %v414 = vsel %vm407, %v247, %v396
  %v415 = vsel %vm407, %v252, %v398
  %424 = vrot.lane.b32.xlu0 %v337, 64
  %v425 = vpop.permute.xlu0 %424
  %426 = vrot.lane.b32.xlu0 %v342, 64
  %v427 = vpop.permute.xlu0 %426
  %428 = vrot.lane.b32.xlu0 %v347, 64
  %v429 = vpop.permute.xlu0 %428
  %430 = vrot.lane.b32.xlu0 %v352, 64
  %v431 = vpop.permute.xlu0 %430
  %432 = vrot.lane.b32.xlu0 %v357, 64
  %v433 = vpop.permute.xlu0 %432
  %434 = vrot.lane.b32.xlu0 %v362, 64
  %v435 = vpop.permute.xlu0 %434
  %436 = vrot.lane.b32.xlu0 %v367, 64
  %v437 = vpop.permute.xlu0 %436
  %438 = vrot.lane.b32.xlu0 %v372, 64
  %v439 = vpop.permute.xlu0 %438
  %v448 = vsel %vm407, %v297, %v425
  %v449 = vsel %vm407, %v302, %v427
  %v450 = vsel %vm407, %v307, %v429
  %v451 = vsel %vm407, %v312, %v431
  %v452 = vsel %vm407, %v317, %v433
  %v453 = vsel %vm407, %v322, %v435
  %v454 = vsel %vm407, %v327, %v437
  %v455 = vsel %vm407, %v332, %v439
  %v456 = vld [vmem:[%s2] sm:$0xff]
  %v457 = vld [vmem:[%s2 + $0x8] sm:$0xff]
  %v458 = vld [vmem:[%s2 + $0x10] sm:$0xff]
  %v459 = vld [vmem:[%s2 + $0x18] sm:$0xff]
  %v460 = vld [vmem:[%s2 + $0x20] sm:$0xff]
  %v461 = vld [vmem:[%s2 + $0x28] sm:$0xff]
  %v462 = vld [vmem:[%s2 + $0x30] sm:$0xff]
  %v463 = vld [vmem:[%s2 + $0x38] sm:$0xff]
  %v464 = vld [vmem:[%s2 + $0x40] sm:$0xff]
  %v465 = vld [vmem:[%s2 + $0x48] sm:$0xff]
  %v466 = vld [vmem:[%s2 + $0x50] sm:$0xff]
  %v467 = vld [vmem:[%s2 + $0x58] sm:$0xff]
  %v468 = vld [vmem:[%s2 + $0x60] sm:$0xff]
  %v469 = vld [vmem:[%s2 + $0x68] sm:$0xff]
  %v470 = vld [vmem:[%s2 + $0x70] sm:$0xff]
  %v471 = vld [vmem:[%s2 + $0x78] sm:$0xff]
  %v472 = vld [vmem:[%s2 + $0x80] sm:$0xff]
  %v473 = vld [vmem:[%s2 + $0x88] sm:$0xff]
  %v474 = vld [vmem:[%s2 + $0x90] sm:$0xff]
  %v475 = vld [vmem:[%s2 + $0x98] sm:$0xff]
  %v476 = vld [vmem:[%s2 + $0xa0] sm:$0xff]
  %v477 = vld [vmem:[%s2 + $0xa8] sm:$0xff]
  %v478 = vld [vmem:[%s2 + $0xb0] sm:$0xff]
  %v479 = vld [vmem:[%s2 + $0xb8] sm:$0xff]
  %v480 = vld [vmem:[%s2 + $0xc0] sm:$0xff]
  %v481 = vld [vmem:[%s2 + $0xc8] sm:$0xff]
  %v482 = vld [vmem:[%s2 + $0xd0] sm:$0xff]
  %v483 = vld [vmem:[%s2 + $0xd8] sm:$0xff]
  %v484 = vld [vmem:[%s2 + $0xe0] sm:$0xff]
  %v485 = vld [vmem:[%s2 + $0xe8] sm:$0xff]
  %v486 = vld [vmem:[%s2 + $0xf0] sm:$0xff]
  %v487 = vld [vmem:[%s2 + $0xf8] sm:$0xff]
  %v488 = vld [vmem:[%s2 + $0x100] sm:$0xff]
  %v489 = vld [vmem:[%s2 + $0x108] sm:$0xff]
  %v490 = vld [vmem:[%s2 + $0x110] sm:$0xff]
  %v491 = vld [vmem:[%s2 + $0x118] sm:$0xff]
  %v492 = vld [vmem:[%s2 + $0x120] sm:$0xff]
  %v493 = vld [vmem:[%s2 + $0x128] sm:$0xff]
  %v494 = vld [vmem:[%s2 + $0x130] sm:$0xff]
  %v495 = vld [vmem:[%s2 + $0x138] sm:$0xff]
  %v496 = vld [vmem:[%s2 + $0x140] sm:$0xff]
  %v497 = vld [vmem:[%s2 + $0x148] sm:$0xff]
  %v498 = vld [vmem:[%s2 + $0x150] sm:$0xff]
  %v499 = vld [vmem:[%s2 + $0x158] sm:$0xff]
  %v500 = vld [vmem:[%s2 + $0x160] sm:$0xff]
  %v501 = vld [vmem:[%s2 + $0x168] sm:$0xff]
  %v502 = vld [vmem:[%s2 + $0x170] sm:$0xff]
  %v503 = vld [vmem:[%s2 + $0x178] sm:$0xff]
  %v504 = vld [vmem:[%s3] sm:$0x7]
  %v506 = vlaneseq
  %v507 = vshrl.u32 %v506, 7
  %v508 = vsub.s32 0, %v507
  %v509 = vrot.slane %v504, %v508
  %v510 = vlaneseq
  %v511 = vshrl.u32 %v510, 7
  %v512 = vsub.s32 1, %v511
  %v513 = vrot.slane %v504, %v512
  %v514 = vlaneseq
  %v515 = vshrl.u32 %v514, 7
  %v516 = vsub.s32 2, %v515
  %v517 = vrot.slane %v504, %v516
  %521 = vmatprep.subr.mxu0 %v502
  %522 = vmatpush1.msra.mxu0 %v501
  %523 = vmatprep.subr.mxu0 %v499
  %524 = vmatpush1.msra.mxu0 %v498
  %525 = vmatprep.subr.mxu0 %v496
  %526 = vmatpush1.msra.mxu0 %v495
  %527 = vmatprep.subr.mxu0 %v493
  %528 = vmatpush1.msra.mxu0 %v492
  %529 = vmatprep.subr.mxu0 %v490
  %530 = vmatpush1.msra.mxu0 %v489
  %531 = vmatprep.subr.mxu0 %v487
  %532 = vmatpush1.msra.mxu0 %v486
  %533 = vmatprep.subr.mxu0 %v484
  %534 = vmatpush1.msra.mxu0 %v483
  %535 = vmatprep.subr.mxu0 %v481
  %536 = vmatpush1.msra.mxu0 %v480
  %537 = vmatprep.subr.mxu0 %v478
  %538 = vmatpush1.msra.mxu0 %v477
  %539 = vmatprep.subr.mxu0 %v475
  %540 = vmatpush1.msra.mxu0 %v474
  %541 = vmatprep.subr.mxu0 %v472
  %542 = vmatpush1.msra.mxu0 %v471
  %543 = vmatprep.subr.mxu0 %v469
  %544 = vmatpush1.msra.mxu0 %v468
  %545 = vmatprep.subr.mxu0 %v466
  %546 = vmatpush1.msra.mxu0 %v465
  %547 = vmatprep.subr.mxu0 %v463
  %548 = vmatpush1.msra.mxu0 %v462
  %549 = vmatprep.subr.mxu0 %v460
  %550 = vmatpush1.msra.mxu0 %v459
  %551 = vmatprep.subr.mxu0 %v457
  %552 = vmatpush1.msra.mxu0 %v456
  %553 = vmatprep.subr.mxu0 0.0
  %554 = vmatpush2.msra.mxu0 0.0
  %555 = vmatprep.subr.mxu0 0.0
  %556 = vmatpush2.msra.mxu0 0.0
  %557 = vmatprep.subr.mxu0 0.0
  %558 = vmatpush2.msra.mxu0 0.0
  %559 = vmatprep.subr.mxu0 0.0
  %560 = vmatpush2.msra.mxu0 0.0
  %561 = vmatprep.subr.mxu0 0.0
  %562 = vmatpush2.msra.mxu0 0.0
  %563 = vmatprep.subr.mxu0 0.0
  %564 = vmatpush2.msra.mxu0 0.0
  %565 = vmatprep.subr.mxu0 0.0
  %566 = vmatpush2.msra.mxu0 0.0
  %567 = vmatprep.subr.mxu0 0.0
  %568 = vmatpush2.msra.mxu0 0.0
  %569 = vmatprep.subr.mxu0 0.0
  %570 = vmatpush2.msra.mxu0 0.0
  %571 = vmatprep.subr.mxu0 0.0
  %572 = vmatpush2.msra.mxu0 0.0
  %573 = vmatprep.subr.mxu0 0.0
  %574 = vmatpush2.msra.mxu0 0.0
  %575 = vmatprep.subr.mxu0 0.0
  %576 = vmatpush2.msra.mxu0 0.0
  %577 = vmatprep.subr.mxu0 0.0
  %578 = vmatpush2.msra.mxu0 0.0
  %579 = vmatprep.subr.mxu0 0.0
  %580 = vmatpush2.msra.mxu0 0.0
  %581 = vmatprep.subr.mxu0 0.0
  %582 = vmatpush2.msra.mxu0 0.0
  %583 = vmatprep.subr.mxu0 0.0
  %584 = vmatpush2.msra.mxu0 0.0
  %585 = vmatprep.mubr.f32.mxu0 0.0
  %586 = vmatmul.mubr.f32.gmra.mxu0 %v408
  %v587 = vpop.f32.mrf.mxu0
  %v588 = vadd.f32 %v509, %v587
  %v589 = vpop.f32.mrf.mxu0
  %v590 = vadd.f32 %v513, %v589
  %591 = vmatprep.mubr.f32.mxu0 0.0
  %592 = vmatmul.mubr.f32.gmra.mxu0 %v409
  %v593 = vpop.f32.mrf.mxu0
  %v594 = vadd.f32 %v509, %v593
  %v595 = vpop.f32.mrf.mxu0
  %v596 = vadd.f32 %v513, %v595
  %597 = vmatprep.mubr.f32.mxu0 0.0
  %598 = vmatmul.mubr.f32.gmra.mxu0 %v410
  %v599 = vpop.f32.mrf.mxu0
  %v600 = vadd.f32 %v509, %v599
  %v601 = vpop.f32.mrf.mxu0
  %v602 = vadd.f32 %v513, %v601
  %603 = vmatprep.mubr.f32.mxu0 0.0
  %604 = vmatmul.mubr.f32.gmra.mxu0 %v411
  %v605 = vpop.f32.mrf.mxu0
  %v606 = vadd.f32 %v509, %v605
  %v607 = vpop.f32.mrf.mxu0
  %v608 = vadd.f32 %v513, %v607
  %609 = vmatprep.mubr.f32.mxu0 0.0
  %610 = vmatmul.mubr.f32.gmra.mxu0 %v412
  %v611 = vpop.f32.mrf.mxu0
  %v612 = vadd.f32 %v509, %v611
  %v613 = vpop.f32.mrf.mxu0
  %v614 = vadd.f32 %v513, %v613
  %615 = vmatprep.mubr.f32.mxu0 0.0
  %616 = vmatmul.mubr.f32.gmra.mxu0 %v413
  %v617 = vpop.f32.mrf.mxu0
  %v618 = vadd.f32 %v509, %v617
  %v619 = vpop.f32.mrf.mxu0
  %v620 = vadd.f32 %v513, %v619
  %621 = vmatprep.mubr.f32.mxu0 0.0
  %622 = vmatmul.mubr.f32.gmra.mxu0 %v414
  %v623 = vpop.f32.mrf.mxu0
  %v624 = vadd.f32 %v509, %v623
  %v625 = vpop.f32.mrf.mxu0
  %v626 = vadd.f32 %v513, %v625
  %627 = vmatprep.mubr.f32.mxu0 0.0
  %628 = vmatmul.mubr.f32.gmra.mxu0 %v415
  %v629 = vpop.f32.mrf.mxu0
  %v630 = vadd.f32 %v509, %v629
  %v631 = vpop.f32.mrf.mxu0
  %v632 = vadd.f32 %v513, %v631
  %633 = vmatprep.mubr.f32.mxu0 0.0
  %634 = vmatmul.mubr.f32.gmra.mxu0 %v448
  %v635 = vpop.f32.mrf.mxu0
  %v636 = vadd.f32 %v509, %v635
  %v637 = vpop.f32.mrf.mxu0
  %v638 = vadd.f32 %v513, %v637
  %639 = vmatprep.mubr.f32.mxu0 0.0
  %640 = vmatmul.mubr.f32.gmra.mxu0 %v449
  %v641 = vpop.f32.mrf.mxu0
  %v642 = vadd.f32 %v509, %v641
  %v643 = vpop.f32.mrf.mxu0
  %v644 = vadd.f32 %v513, %v643
  %645 = vmatprep.mubr.f32.mxu0 0.0
  %646 = vmatmul.mubr.f32.gmra.mxu0 %v450
  %v647 = vpop.f32.mrf.mxu0
  %v648 = vadd.f32 %v509, %v647
  %v649 = vpop.f32.mrf.mxu0
  %v650 = vadd.f32 %v513, %v649
  %651 = vmatprep.mubr.f32.mxu0 0.0
  %652 = vmatmul.mubr.f32.gmra.mxu0 %v451
  %v653 = vpop.f32.mrf.mxu0
  %v654 = vadd.f32 %v509, %v653
  %v655 = vpop.f32.mrf.mxu0
  %v656 = vadd.f32 %v513, %v655
  %657 = vmatprep.mubr.f32.mxu0 0.0
  %658 = vmatmul.mubr.f32.gmra.mxu0 %v452
  %v659 = vpop.f32.mrf.mxu0
  %v660 = vadd.f32 %v509, %v659
  %v661 = vpop.f32.mrf.mxu0
  %v662 = vadd.f32 %v513, %v661
  %663 = vmatprep.mubr.f32.mxu0 0.0
  %664 = vmatmul.mubr.f32.gmra.mxu0 %v453
  %v665 = vpop.f32.mrf.mxu0
  %v666 = vadd.f32 %v509, %v665
  %v667 = vpop.f32.mrf.mxu0
  %v668 = vadd.f32 %v513, %v667
  %669 = vmatprep.mubr.f32.mxu0 0.0
  %670 = vmatmul.mubr.f32.gmra.mxu0 %v454
  %v671 = vpop.f32.mrf.mxu0
  %v672 = vadd.f32 %v509, %v671
  %v673 = vpop.f32.mrf.mxu0
  %v674 = vadd.f32 %v513, %v673
  %675 = vmatprep.mubr.f32.mxu0 0.0
  %676 = vmatmul.mubr.f32.gmra.mxu0 %v455
  %v677 = vpop.f32.mrf.mxu0
  %v678 = vadd.f32 %v509, %v677
  %v679 = vpop.f32.mrf.mxu0
  %v680 = vadd.f32 %v513, %v679
  %681 = vdwg.mxu0
  %682 = vmatprep.subr.mxu0 0.0
  %683 = vmatpush1.msra.mxu0 %v503
  %684 = vmatprep.subr.mxu0 0.0
  %685 = vmatpush1.msra.mxu0 %v500
  %686 = vmatprep.subr.mxu0 0.0
  %687 = vmatpush1.msra.mxu0 %v497
  %688 = vmatprep.subr.mxu0 0.0
  %689 = vmatpush1.msra.mxu0 %v494
  %690 = vmatprep.subr.mxu0 0.0
  %691 = vmatpush1.msra.mxu0 %v491
  %692 = vmatprep.subr.mxu0 0.0
  %693 = vmatpush1.msra.mxu0 %v488
  %694 = vmatprep.subr.mxu0 0.0
  %695 = vmatpush1.msra.mxu0 %v485
  %696 = vmatprep.subr.mxu0 0.0
  %697 = vmatpush1.msra.mxu0 %v482
  %698 = vmatprep.subr.mxu0 0.0
  %699 = vmatpush1.msra.mxu0 %v479
  %700 = vmatprep.subr.mxu0 0.0
  %701 = vmatpush1.msra.mxu0 %v476
  %702 = vmatprep.subr.mxu0 0.0
  %703 = vmatpush1.msra.mxu0 %v473
  %704 = vmatprep.subr.mxu0 0.0
  %705 = vmatpush1.msra.mxu0 %v470
  %706 = vmatprep.subr.mxu0 0.0
  %707 = vmatpush1.msra.mxu0 %v467
  %708 = vmatprep.subr.mxu0 0.0
  %709 = vmatpush1.msra.mxu0 %v464
  %710 = vmatprep.subr.mxu0 0.0
  %711 = vmatpush1.msra.mxu0 %v461
  %712 = vmatprep.subr.mxu0 0.0
  %713 = vmatpush1.msra.mxu0 %v458
  %714 = vmatprep.subr.mxu0 0.0
  %715 = vmatpush2.msra.mxu0 0.0
  %716 = vmatprep.subr.mxu0 0.0
  %717 = vmatpush2.msra.mxu0 0.0
  %718 = vmatprep.subr.mxu0 0.0
  %719 = vmatpush2.msra.mxu0 0.0
  %720 = vmatprep.subr.mxu0 0.0
  %721 = vmatpush2.msra.mxu0 0.0
  %722 = vmatprep.subr.mxu0 0.0
  %723 = vmatpush2.msra.mxu0 0.0
  %724 = vmatprep.subr.mxu0 0.0
  %725 = vmatpush2.msra.mxu0 0.0
  %726 = vmatprep.subr.mxu0 0.0
  %727 = vmatpush2.msra.mxu0 0.0
  %728 = vmatprep.subr.mxu0 0.0
  %729 = vmatpush2.msra.mxu0 0.0
  %730 = vmatprep.subr.mxu0 0.0
  %731 = vmatpush2.msra.mxu0 0.0
  %732 = vmatprep.subr.mxu0 0.0
  %733 = vmatpush2.msra.mxu0 0.0
  %734 = vmatprep.subr.mxu0 0.0
  %735 = vmatpush2.msra.mxu0 0.0
  %736 = vmatprep.subr.mxu0 0.0
  %737 = vmatpush2.msra.mxu0 0.0
  %738 = vmatprep.subr.mxu0 0.0
  %739 = vmatpush2.msra.mxu0 0.0
  %740 = vmatprep.subr.mxu0 0.0
  %741 = vmatpush2.msra.mxu0 0.0
  %742 = vmatprep.subr.mxu0 0.0
  %743 = vmatpush2.msra.mxu0 0.0
  %744 = vmatprep.subr.mxu0 0.0
  %745 = vmatpush2.msra.mxu0 0.0
  %746 = vmatprep.mubr.f32.mxu0 0.0
  %747 = vmatmul.mubr.f32.gmra.mxu0 %v408
  %v748 = vpop.f32.mrf.mxu0
  %v749 = vadd.f32 %v517, %v748
  %v750 = vpop.f32.mrf.mxu0
  %751 = vmatprep.mubr.f32.mxu0 0.0
  %752 = vmatmul.mubr.f32.gmra.mxu0 %v409
  %v753 = vpop.f32.mrf.mxu0
  %v754 = vadd.f32 %v517, %v753
  %v755 = vpop.f32.mrf.mxu0
  %756 = vmatprep.mubr.f32.mxu0 0.0
  %757 = vmatmul.mubr.f32.gmra.mxu0 %v410
  %v758 = vpop.f32.mrf.mxu0
  %v759 = vadd.f32 %v517, %v758
  %v760 = vpop.f32.mrf.mxu0
  %761 = vmatprep.mubr.f32.mxu0 0.0
  %762 = vmatmul.mubr.f32.gmra.mxu0 %v411
  %v763 = vpop.f32.mrf.mxu0
  %v764 = vadd.f32 %v517, %v763
  %v765 = vpop.f32.mrf.mxu0
  %766 = vmatprep.mubr.f32.mxu0 0.0
  %767 = vmatmul.mubr.f32.gmra.mxu0 %v412
  %v768 = vpop.f32.mrf.mxu0
  %v769 = vadd.f32 %v517, %v768
  %v770 = vpop.f32.mrf.mxu0
  %771 = vmatprep.mubr.f32.mxu0 0.0
  %772 = vmatmul.mubr.f32.gmra.mxu0 %v413
  %v773 = vpop.f32.mrf.mxu0
  %v774 = vadd.f32 %v517, %v773
  %v775 = vpop.f32.mrf.mxu0
  %776 = vmatprep.mubr.f32.mxu0 0.0
  %777 = vmatmul.mubr.f32.gmra.mxu0 %v414
  %v778 = vpop.f32.mrf.mxu0
  %v779 = vadd.f32 %v517, %v778
  %v780 = vpop.f32.mrf.mxu0
  %781 = vmatprep.mubr.f32.mxu0 0.0
  %782 = vmatmul.mubr.f32.gmra.mxu0 %v415
  %v783 = vpop.f32.mrf.mxu0
  %v784 = vadd.f32 %v517, %v783
  %v785 = vpop.f32.mrf.mxu0
  %786 = vmatprep.mubr.f32.mxu0 0.0
  %787 = vmatmul.mubr.f32.gmra.mxu0 %v448
  %v788 = vpop.f32.mrf.mxu0
  %v789 = vadd.f32 %v517, %v788
  %v790 = vpop.f32.mrf.mxu0
  %791 = vmatprep.mubr.f32.mxu0 0.0
  %792 = vmatmul.mubr.f32.gmra.mxu0 %v449
  %v793 = vpop.f32.mrf.mxu0
  %v794 = vadd.f32 %v517, %v793
  %v795 = vpop.f32.mrf.mxu0
  %796 = vmatprep.mubr.f32.mxu0 0.0
  %797 = vmatmul.mubr.f32.gmra.mxu0 %v450
  %v798 = vpop.f32.mrf.mxu0
  %v799 = vadd.f32 %v517, %v798
  %v800 = vpop.f32.mrf.mxu0
  %801 = vmatprep.mubr.f32.mxu0 0.0
  %802 = vmatmul.mubr.f32.gmra.mxu0 %v451
  %v803 = vpop.f32.mrf.mxu0
  %v804 = vadd.f32 %v517, %v803
  %v805 = vpop.f32.mrf.mxu0
  %806 = vmatprep.mubr.f32.mxu0 0.0
  %807 = vmatmul.mubr.f32.gmra.mxu0 %v452
  %v808 = vpop.f32.mrf.mxu0
  %v809 = vadd.f32 %v517, %v808
  %v810 = vpop.f32.mrf.mxu0
  %811 = vmatprep.mubr.f32.mxu0 0.0
  %812 = vmatmul.mubr.f32.gmra.mxu0 %v453
  %v813 = vpop.f32.mrf.mxu0
  %v814 = vadd.f32 %v517, %v813
  %v815 = vpop.f32.mrf.mxu0
  %816 = vmatprep.mubr.f32.mxu0 0.0
  %817 = vmatmul.mubr.f32.gmra.mxu0 %v454
  %v818 = vpop.f32.mrf.mxu0
  %v819 = vadd.f32 %v517, %v818
  %v820 = vpop.f32.mrf.mxu0
  %821 = vmatprep.mubr.f32.mxu0 0.0
  %822 = vmatmul.mubr.f32.gmra.mxu0 %v455
  %v823 = vpop.f32.mrf.mxu0
  %v824 = vadd.f32 %v517, %v823
  %v825 = vpop.f32.mrf.mxu0
  %826 = vdwg.mxu0
  %827 = vst [vmem:[%s4] sm:$0xff] %v588
  %828 = vst [vmem:[%s4 + $0x8] sm:$0xff] %v590
  %829 = vst [vmem:[%s4 + $0x10] sm:$0xff] %v749
  %830 = vst [vmem:[%s4 + $0x18] sm:$0xff] %v594
  %831 = vst [vmem:[%s4 + $0x20] sm:$0xff] %v596
  %832 = vst [vmem:[%s4 + $0x28] sm:$0xff] %v754
  %833 = vst [vmem:[%s4 + $0x30] sm:$0xff] %v600
  %834 = vst [vmem:[%s4 + $0x38] sm:$0xff] %v602
  %835 = vst [vmem:[%s4 + $0x40] sm:$0xff] %v759
  %836 = vst [vmem:[%s4 + $0x48] sm:$0xff] %v606
  %837 = vst [vmem:[%s4 + $0x50] sm:$0xff] %v608
  %838 = vst [vmem:[%s4 + $0x58] sm:$0xff] %v764
  %839 = vst [vmem:[%s4 + $0x60] sm:$0xff] %v612
  %840 = vst [vmem:[%s4 + $0x68] sm:$0xff] %v614
  %841 = vst [vmem:[%s4 + $0x70] sm:$0xff] %v769
  %842 = vst [vmem:[%s4 + $0x78] sm:$0xff] %v618
  %843 = vst [vmem:[%s4 + $0x80] sm:$0xff] %v620
  %844 = vst [vmem:[%s4 + $0x88] sm:$0xff] %v774
  %845 = vst [vmem:[%s4 + $0x90] sm:$0xff] %v624
  %846 = vst [vmem:[%s4 + $0x98] sm:$0xff] %v626
  %847 = vst [vmem:[%s4 + $0xa0] sm:$0xff] %v779
  %848 = vst [vmem:[%s4 + $0xa8] sm:$0xff] %v630
  %849 = vst [vmem:[%s4 + $0xb0] sm:$0xff] %v632
  %850 = vst [vmem:[%s4 + $0xb8] sm:$0xff] %v784
  %851 = vst [vmem:[%s4 + $0xc0] sm:$0xff] %v636
  %852 = vst [vmem:[%s4 + $0xc8] sm:$0xff] %v638
  %853 = vst [vmem:[%s4 + $0xd0] sm:$0xff] %v789
  %854 = vst [vmem:[%s4 + $0xd8] sm:$0xff] %v642
  %855 = vst [vmem:[%s4 + $0xe0] sm:$0xff] %v644
  %856 = vst [vmem:[%s4 + $0xe8] sm:$0xff] %v794
  %857 = vst [vmem:[%s4 + $0xf0] sm:$0xff] %v648
  %858 = vst [vmem:[%s4 + $0xf8] sm:$0xff] %v650
  %859 = vst [vmem:[%s4 + $0x100] sm:$0xff] %v799
  %860 = vst [vmem:[%s4 + $0x108] sm:$0xff] %v654
  %861 = vst [vmem:[%s4 + $0x110] sm:$0xff] %v656
  %862 = vst [vmem:[%s4 + $0x118] sm:$0xff] %v804
  %863 = vst [vmem:[%s4 + $0x120] sm:$0xff] %v660
  %864 = vst [vmem:[%s4 + $0x128] sm:$0xff] %v662
  %865 = vst [vmem:[%s4 + $0x130] sm:$0xff] %v809
  %866 = vst [vmem:[%s4 + $0x138] sm:$0xff] %v666
  %867 = vst [vmem:[%s4 + $0x140] sm:$0xff] %v668
  %868 = vst [vmem:[%s4 + $0x148] sm:$0xff] %v814
  %869 = vst [vmem:[%s4 + $0x150] sm:$0xff] %v672
  %870 = vst [vmem:[%s4 + $0x158] sm:$0xff] %v674
  %871 = vst [vmem:[%s4 + $0x160] sm:$0xff] %v819
  %872 = vst [vmem:[%s4 + $0x168] sm:$0xff] %v678
  %873 = vst [vmem:[%s4 + $0x170] sm:$0xff] %v680
  %874 = vst [vmem:[%s4 + $0x178] sm:$0xff] %v824
  // Predicated region
  $region18: #{bias_correction_forward.1} parent=0 // pred_check
    _
  $region19: #{bias_correction_forward.1} parent=0 // pred_check_branch
    %876 = sbr.rel (0) target = $region21
  $region20: #{bias_correction_forward.1} parent=0 // pred_region
    _
  $region21: #{bias_correction_forward.1} parent=0 // pred_fallthru
    _
  // Predicated region
  $region22: #{bias_correction_forward.1} parent=0 // pred_check
    _
  $region23: #{bias_correction_forward.1} parent=0 // pred_check_branch
    %878 = sbr.rel (0) target = $region25
  $region24: #{bias_correction_forward.1} parent=0 // pred_region
    _
  $region25: #{bias_correction_forward.1} parent=0 // pred_fallthru
    _

</llo_original>
